<compile_context>
chip_gen: v7x
topology: tpu7x:2x2x1
jax: 0.10.0
libtpu: 0.0.40
codegen_flags: <defaults>
</compile_context>

<pallas_src>
import jax
import jax.numpy as jnp
from jax.experimental import pallas as pl
from jax.experimental.pallas import tpu as pltpu


def bn_relu_conv1x1_kernel(x_ref, scale_ref, bias_ref, w_ref, out_ref):
    # x_ref:     (N, Cin, P)   input pixels, channels-first (P = H*W)
    # scale_ref: (Cin, 1)      folded BN scale = gamma / sqrt(var + eps)
    # bias_ref:  (Cin, 1)      folded BN bias  = beta - mean * scale
    # w_ref:     (Cout, Cin)   1x1 conv weight (bias=False in the module)
    # out_ref:   (N, Cout, P)  lane-dense output (last dim = pixels)
    n_imgs = x_ref.shape[0]
    scale = scale_ref[...]            # (Cin, 1) broadcasts along pixels
    bias = bias_ref[...]
    w = w_ref[...]
    for n in range(n_imgs):           # N is small & static -> unrolled
        # BatchNorm (inference, folded) + ReLU, channels-first.
        h = jnp.maximum(x_ref[n] * scale + bias, 0.0)            # (Cin, P)
        # 1x1 conv == channel-mixing matmul on the MXU.
        y = jnp.dot(w, h, preferred_element_type=jnp.float32)    # (Cout, P)
        out_ref[n] = y.astype(out_ref.dtype)


def bn_relu_conv1x1_forward(x_nchw, bn_gamma, bn_beta, bn_mean, bn_var, w,
                            *, stride=1, groups=1, eps=1e-5):
    """x_nchw: (N, Cin, H, W) float32; w: (Cout, Cin, 1, 1). Returns (N, Cout, H', W')."""
    # TODO(synk): groups > 1 (grouped 1x1 conv) not implemented; module default is groups=1.
    assert groups == 1, "grouped 1x1 conv not implemented"
    if stride != 1:
        # For a 1x1 conv, a strided conv equals the conv on the spatially
        # subsampled input; BN/ReLU are pointwise so they commute with it.
        x_nchw = x_nchw[:, :, ::stride, ::stride]

    N, Cin, H, W = x_nchw.shape
    Cout = w.shape[0]
    P = H * W

    x_flat = x_nchw.reshape(N, Cin, P)                     # zero-cost reshape
    inv_std = 1.0 / jnp.sqrt(bn_var + eps)
    scale = (bn_gamma * inv_std).reshape(Cin, 1).astype(jnp.float32)
    bias = (bn_beta - bn_mean * bn_gamma * inv_std).reshape(Cin, 1).astype(jnp.float32)
    w_k = w.reshape(Cout, Cin).astype(jnp.float32)         # (Cout, Cin, 1, 1) -> (Cout, Cin)

    out_flat = pl.pallas_call(
        bn_relu_conv1x1_kernel,
        out_shape=jax.ShapeDtypeStruct((N, Cout, P), jnp.float32),
        grid_spec=pltpu.PrefetchScalarGridSpec(
            num_scalar_prefetch=0,
            grid=(1,),  # whole problem in one step; it easily fits in VMEM
            in_specs=[
                pl.BlockSpec((N, Cin, P), lambda i: (0, 0, 0)),
                pl.BlockSpec((Cin, 1), lambda i: (0, 0)),
                pl.BlockSpec((Cin, 1), lambda i: (0, 0)),
                pl.BlockSpec((Cout, Cin), lambda i: (0, 0)),
            ],
            out_specs=pl.BlockSpec((N, Cout, P), lambda i: (0, 0, 0)),
        ),
        compiler_params=pltpu.CompilerParams(
            dimension_semantics=("arbitrary",)),
    )(x_flat, scale, bias, w_k)

    return out_flat.reshape(N, Cout, H, W)                 # zero-cost reshape


def reference_forward(x_nchw, bn_gamma, bn_beta, bn_mean, bn_var, w, eps=1e-5):
    """Pure-JAX reference (BN eval -> ReLU -> 1x1 conv, no bias), NCHW."""
    scale = bn_gamma / jnp.sqrt(bn_var + eps)
    bias = bn_beta - bn_mean * scale
    h = x_nchw * scale[None, :, None, None] + bias[None, :, None, None]
    h = jnp.maximum(h, 0.0)
    return jax.lax.conv_general_dilated(
        h, w, window_strides=(1, 1), padding="VALID",
        dimension_numbers=("NCHW", "OIHW", "NCHW"))


if __name__ == "__main__":
    # Small shapes consistent with the module: BN_ReLU_Conv1x1(in_chs=4,
    # out_chs=32) applied to x of shape (2, 4, 16, 16).
    N, Cin, H, W = 2, 4, 16, 16
    Cout = 32

    key = jax.random.PRNGKey(0)
    k_x, k_g, k_b, k_m, k_v, k_w = jax.random.split(key, 6)

    x = jax.random.normal(k_x, (N, Cin, H, W), dtype=jnp.float32)
    # BatchNorm2d parameters / running stats (inference semantics).
    bn_gamma = 1.0 + 0.1 * jax.random.normal(k_g, (Cin,), dtype=jnp.float32)
    bn_beta = 0.1 * jax.random.normal(k_b, (Cin,), dtype=jnp.float32)
    bn_mean = 0.1 * jax.random.normal(k_m, (Cin,), dtype=jnp.float32)
    bn_var = jnp.abs(jax.random.normal(k_v, (Cin,), dtype=jnp.float32)) + 0.5
    # 1x1 Conv2d weight, bias=False.
    w = jax.random.normal(k_w, (Cout, Cin, 1, 1), dtype=jnp.float32) * 0.1

    out = bn_relu_conv1x1_forward(x, bn_gamma, bn_beta, bn_mean, bn_var, w)
    out = jax.block_until_ready(out)

    ref = reference_forward(x, bn_gamma, bn_beta, bn_mean, bn_var, w)
    ref = jax.block_until_ready(ref)

    assert out.shape == (N, Cout, H, W), out.shape
    max_err = float(jnp.max(jnp.abs(out - ref)))
    assert jnp.allclose(out, ref, atol=1e-4, rtol=1e-4), max_err

    print("KERNEL_OK")
</pallas_src>

<mosaic_0001>
module attributes {stable_mosaic.version = 11 : i64} {
  func.func @bn_relu_conv1x1_kernel(%arg0: i32, %arg1: memref<2x4x256xf32, #tpu.memory_space<vmem>>, %arg2: memref<4x1xf32, #tpu.memory_space<vmem>>, %arg3: memref<4x1xf32, #tpu.memory_space<vmem>>, %arg4: memref<32x4xf32, #tpu.memory_space<vmem>>, %arg5: memref<2x32x256xf32, #tpu.memory_space<vmem>>) attributes {dimension_semantics = [#tpu.dimension_semantics<arbitrary>], iteration_bounds = array<i64: 1>, scalar_prefetch = 0 : i64, scratch_operands = 0 : i64, tpu.core_type = #tpu.core_type<tc>, window_params = [{pipeline_mode = #tpu.pipeline_mode<synchronous>, transform_indices = @transform_0, window_bounds = array<i64: 2, 4, 256>}, {pipeline_mode = #tpu.pipeline_mode<synchronous>, transform_indices = @transform_1, window_bounds = array<i64: 4, 1>}, {pipeline_mode = #tpu.pipeline_mode<synchronous>, transform_indices = @transform_2, window_bounds = array<i64: 4, 1>}, {pipeline_mode = #tpu.pipeline_mode<synchronous>, transform_indices = @transform_3, window_bounds = array<i64: 32, 4>}, {pipeline_mode = #tpu.pipeline_mode<synchronous>, transform_indices = @transform_4, window_bounds = array<i64: 2, 32, 256>}]} {
    %c0 = arith.constant 0 : index
    %c0_0 = arith.constant 0 : index
    %0 = vector.load %arg2[%c0, %c0_0] : memref<4x1xf32, #tpu.memory_space<vmem>>, vector<4x1xf32>
    %c0_1 = arith.constant 0 : index
    %c0_2 = arith.constant 0 : index
    %1 = vector.load %arg3[%c0_1, %c0_2] : memref<4x1xf32, #tpu.memory_space<vmem>>, vector<4x1xf32>
    %c0_3 = arith.constant 0 : index
    %c0_4 = arith.constant 0 : index
    %2 = vector.load %arg4[%c0_3, %c0_4] : memref<32x4xf32, #tpu.memory_space<vmem>>, vector<32x4xf32>
    %c0_5 = arith.constant 0 : index
    %c0_6 = arith.constant 0 : index
    %c0_7 = arith.constant 0 : index
    %3 = vector.load %arg1[%c0_5, %c0_6, %c0_7] : memref<2x4x256xf32, #tpu.memory_space<vmem>>, vector<1x4x256xf32>
    %4 = vector.shape_cast %3 : vector<1x4x256xf32> to vector<4x256xf32>
    %5 = vector.broadcast %0 : vector<4x1xf32> to vector<4x256xf32>
    %6 = arith.mulf %4, %5 : vector<4x256xf32>
    %7 = vector.broadcast %1 : vector<4x1xf32> to vector<4x256xf32>
    %8 = arith.addf %6, %7 : vector<4x256xf32>
    %cst = arith.constant 0.000000e+00 : f32
    %9 = vector.broadcast %cst : f32 to vector<4x256xf32>
    %10 = arith.maximumf %8, %9 : vector<4x256xf32>
    %cst_8 = arith.constant dense<0.000000e+00> : vector<32x256xf32>
    %11 = tpu.matmul %2, %10, %cst_8 {dimension_numbers = #tpu.dot_dimension_numbers<[1], [0], [0], [1], [0, 0, 1, 1], [], []>} : vector<32x4xf32>, vector<4x256xf32>, vector<32x256xf32> -> vector<32x256xf32>
    %c0_9 = arith.constant 0 : index
    %c0_10 = arith.constant 0 : index
    %c0_11 = arith.constant 0 : index
    %12 = vector.load %arg5[%c0_9, %c0_10, %c0_11] : memref<2x32x256xf32, #tpu.memory_space<vmem>>, vector<1x32x256xf32>
    %13 = vector.shape_cast %12 : vector<1x32x256xf32> to vector<32x256xf32>
    %14 = vector.shape_cast %11 : vector<32x256xf32> to vector<1x32x256xf32>
    tpu.vector_store %arg5[%c0_9, %c0_10, %c0_11], %14 {strides = array<i32>} : memref<2x32x256xf32, #tpu.memory_space<vmem>>, vector<1x32x256xf32>,
    %c1 = arith.constant 1 : index
    %c0_12 = arith.constant 0 : index
    %c0_13 = arith.constant 0 : index
    %15 = vector.load %arg1[%c1, %c0_12, %c0_13] : memref<2x4x256xf32, #tpu.memory_space<vmem>>, vector<1x4x256xf32>
    %16 = vector.shape_cast %15 : vector<1x4x256xf32> to vector<4x256xf32>
    %17 = vector.broadcast %0 : vector<4x1xf32> to vector<4x256xf32>
    %18 = arith.mulf %16, %17 : vector<4x256xf32>
    %19 = vector.broadcast %1 : vector<4x1xf32> to vector<4x256xf32>
    %20 = arith.addf %18, %19 : vector<4x256xf32>
    %cst_14 = arith.constant 0.000000e+00 : f32
    %21 = vector.broadcast %cst_14 : f32 to vector<4x256xf32>
    %22 = arith.maximumf %20, %21 : vector<4x256xf32>
    %cst_15 = arith.constant dense<0.000000e+00> : vector<32x256xf32>
    %23 = tpu.matmul %2, %22, %cst_15 {dimension_numbers = #tpu.dot_dimension_numbers<[1], [0], [0], [1], [0, 0, 1, 1], [], []>} : vector<32x4xf32>, vector<4x256xf32>, vector<32x256xf32> -> vector<32x256xf32>
    %c1_16 = arith.constant 1 : index
    %c0_17 = arith.constant 0 : index
    %c0_18 = arith.constant 0 : index
    %24 = vector.load %arg5[%c1_16, %c0_17, %c0_18] : memref<2x32x256xf32, #tpu.memory_space<vmem>>, vector<1x32x256xf32>
    %25 = vector.shape_cast %24 : vector<1x32x256xf32> to vector<32x256xf32>
    %26 = vector.shape_cast %23 : vector<32x256xf32> to vector<1x32x256xf32>
    tpu.vector_store %arg5[%c1_16, %c0_17, %c0_18], %26 {strides = array<i32>} : memref<2x32x256xf32, #tpu.memory_space<vmem>>, vector<1x32x256xf32>,
    return
  }
  func.func @transform_0(%arg0: i32) -> (i32, i32, i32) {
    %c0_i32 = arith.constant 0 : i32
    %c0_i32_0 = arith.constant 0 : i32
    %c0_i32_1 = arith.constant 0 : i32
    %c0_i32_2 = arith.constant 0 : i32
    return %c0_i32, %c0_i32_0, %c0_i32_1 : i32, i32, i32
  }
  func.func @transform_1(%arg0: i32) -> (i32, i32) {
    %c0_i32 = arith.constant 0 : i32
    %c0_i32_0 = arith.constant 0 : i32
    %c0_i32_1 = arith.constant 0 : i32
    return %c0_i32, %c0_i32_0 : i32, i32
  }
  func.func @transform_2(%arg0: i32) -> (i32, i32) {
    %c0_i32 = arith.constant 0 : i32
    %c0_i32_0 = arith.constant 0 : i32
    %c0_i32_1 = arith.constant 0 : i32
    return %c0_i32, %c0_i32_0 : i32, i32
  }
  func.func @transform_3(%arg0: i32) -> (i32, i32) {
    %c0_i32 = arith.constant 0 : i32
    %c0_i32_0 = arith.constant 0 : i32
    %c0_i32_1 = arith.constant 0 : i32
    return %c0_i32, %c0_i32_0 : i32, i32
  }
  func.func @transform_4(%arg0: i32) -> (i32, i32, i32) {
    %c0_i32 = arith.constant 0 : i32
    %c0_i32_0 = arith.constant 0 : i32
    %c0_i32_1 = arith.constant 0 : i32
    %c0_i32_2 = arith.constant 0 : i32
    return %c0_i32, %c0_i32_0, %c0_i32_1 : i32, i32, i32
  }
}

</mosaic_0001>

<llo_original>
// kernel: tpu_custom_call.1
$region0: #{tpu_custom_call.1}
  #allocation0 [shape = 'u32[]', space=smem, size = 0x4, offset = 0x4, fixed_abs, tag = 'smem constant byte address 0x4 - core index']
  #allocation1 [shape = 'u32[144,128]{1,0:T(1,128)}', space=vmem, size = 0x12000, scoped, tag = 'internal scratch']
  %s0 = inlined_call_operand.vmem [shape: f32[2,4,256], index: 0, kind: input, shape index: {}]
  %s1 = inlined_call_operand.vmem [shape: f32[4,1], index: 1, kind: input, shape index: {}]
  %s2 = inlined_call_operand.vmem [shape: f32[4,1], index: 2, kind: input, shape index: {}]
  %s3 = inlined_call_operand.vmem [shape: f32[32,4], index: 3, kind: input, shape index: {}]
  %s4 = inlined_call_operand.hbm [shape: f32[2,32,256], index: 4, kind: output, shape index: {}]
  %s5 = sld [smem:[#allocation0]]
  $region26: #{tpu_custom_call.1} parent=0
    _
  %s7 = ssub.s32 1, %s5
  %s8 = scalar_select 0, %s7, %s5
  $region1: #{tpu_custom_call.1} parent=0
    #allocation2 [shape = 'u8[65536]{0}', space=vmem, size = 0x10000, scoped, tag = 'output window, operand 0, single buffered']
    #allocation3 [shape = 's32[1]{0}', space=sflag, size = 0x4, scoped, tag = 'scoped memory for tpu_custom_call.1']
    %9 = vsyncpa [#allocation3], 0
    // Predicated region
    $region2: #{tpu_custom_call.1} parent=1 // pred_check
      _
    $region3: #{tpu_custom_call.1} parent=1 // pred_check_branch
      %11 = sbr.rel (0) target = $region5
    $region4: #{tpu_custom_call.1} parent=1 // pred_region
      _
    $region5: #{tpu_custom_call.1} parent=1 // pred_fallthru
      _
    // Predicated region
    $region6: #{tpu_custom_call.1} parent=1 // pred_check
      _
    $region7: #{tpu_custom_call.1} parent=1 // pred_check_branch
      %13 = sbr.rel (0) target = $region9
    $region8: #{tpu_custom_call.1} parent=1 // pred_region
      _
    $region9: #{tpu_custom_call.1} parent=1 // pred_fallthru
      _
    // Predicated region
    $region10: #{tpu_custom_call.1} parent=1 // pred_check
      _
    $region11: #{tpu_custom_call.1} parent=1 // pred_check_branch
      %15 = sbr.rel (0) target = $region13
    $region12: #{tpu_custom_call.1} parent=1 // pred_region
      _
    $region13: #{tpu_custom_call.1} parent=1 // pred_fallthru
      _
    // Predicated region
    $region14: #{tpu_custom_call.1} parent=1 // pred_check
      _
    $region15: #{tpu_custom_call.1} parent=1 // pred_check_branch
      %17 = sbr.rel (0) target = $region17
    $region16: #{tpu_custom_call.1} parent=1 // pred_region
      _
    $region17: #{tpu_custom_call.1} parent=1 // pred_fallthru
      _
    %v18 = vld [vmem:[%s1] sm:$0xf]
    %v19 = vld [vmem:[%s2] sm:$0xf]
    %v20 = vld [vmem:[%s3] sm:$0xff]
    %v21 = vld [vmem:[%s3 + $0x8] sm:$0xff]
    %v22 = vld [vmem:[%s3 + $0x10] sm:$0xff]
    %v23 = vld [vmem:[%s3 + $0x18] sm:$0xff]
    %v24 = vld [vmem:[%s0] sm:$0xff]
    %26 = vset.pattern.permute.xlu0 0
    %27 = vperm.xlu0 %26, %v18
    %v28 = vpop.permute.xlu0 %27
    %v30 = vunpack.c.l.s4 839922192
    %v31 = vunpack.c.0.s8 %v30
    %v32 = vlaneseq
    %v33 = vshrl.u32 %v32, 7
    %v34 = vsub.s32 %v31, %v33
    %v35 = vrot.slane %v28, %v34
    %v37 = vmul.f32 %v24, %v35
    %39 = vset.pattern.permute.xlu0 0
    %40 = vperm.xlu0 %39, %v19
    %v41 = vpop.permute.xlu0 %40
    %v43 = vunpack.c.l.s4 839922192
    %v44 = vunpack.c.0.s8 %v43
    %v45 = vlaneseq
    %v46 = vshrl.u32 %v45, 7
    %v47 = vsub.s32 %v44, %v46
    %v48 = vrot.slane %v41, %v47
    %v50 = vadd.f32 %v37, %v48
    %v51 = vmax.f32 %v50, 0.0
    %v53 = vcombine.high %v51, %v51
    %vm54 = vcmask 31744
    %v56 = vsel %vm54, %v20, 0
    %v59 = vsel %vm54, %v21, 0
    %v62 = vsel %vm54, %v22, 0
    %v65 = vsel %vm54, %v23, 0
    %vm67 = vcmask 1043456
    %v68 = vsel %vm67, %v51, 0
    %v70 = vsel %vm67, %v53, 0
    %72 = vmatprep.subr.mxu0 %v70
    %73 = vmatpush1.msra.mxu0 %v68
    %74 = vmatprep.subr.mxu0 0.0
    %75 = vmatpush1.msra.mxu0 0.0
    %76 = vmatprep.subr.mxu0 0.0
    %77 = vmatpush1.msra.mxu0 0.0
    %78 = vmatprep.subr.mxu0 0.0
    %79 = vmatpush1.msra.mxu0 0.0
    %80 = vmatprep.subr.mxu0 0.0
    %81 = vmatpush1.msra.mxu0 0.0
    %82 = vmatprep.subr.mxu0 0.0
    %83 = vmatpush1.msra.mxu0 0.0
    %84 = vmatprep.subr.mxu0 0.0
    %85 = vmatpush1.msra.mxu0 0.0
    %86 = vmatprep.subr.mxu0 0.0
    %87 = vmatpush1.msra.mxu0 0.0
    %88 = vmatprep.subr.mxu0 0.0
    %89 = vmatpush1.msra.mxu0 0.0
    %90 = vmatprep.subr.mxu0 0.0
    %91 = vmatpush1.msra.mxu0 0.0
    %92 = vmatprep.subr.mxu0 0.0
    %93 = vmatpush1.msra.mxu0 0.0
    %94 = vmatprep.subr.mxu0 0.0
    %95 = vmatpush1.msra.mxu0 0.0
    %96 = vmatprep.subr.mxu0 0.0
    %97 = vmatpush1.msra.mxu0 0.0
    %98 = vmatprep.subr.mxu0 0.0
    %99 = vmatpush1.msra.mxu0 0.0
    %100 = vmatprep.subr.mxu0 0.0
    %101 = vmatpush1.msra.mxu0 0.0
    %102 = vmatprep.subr.mxu0 0.0
    %103 = vmatpush1.msra.mxu0 0.0
    %104 = vmatprep.subr.mxu0 0.0
    %105 = vmatpush1.msra.mxu0 0.0
    %106 = vmatprep.subr.mxu0 0.0
    %107 = vmatpush1.msra.mxu0 0.0
    %108 = vmatprep.subr.mxu0 0.0
    %109 = vmatpush1.msra.mxu0 0.0
    %110 = vmatprep.subr.mxu0 0.0
    %111 = vmatpush1.msra.mxu0 0.0
    %112 = vmatprep.subr.mxu0 0.0
    %113 = vmatpush1.msra.mxu0 0.0
    %114 = vmatprep.subr.mxu0 0.0
    %115 = vmatpush1.msra.mxu0 0.0
    %116 = vmatprep.subr.mxu0 0.0
    %117 = vmatpush1.msra.mxu0 0.0
    %118 = vmatprep.subr.mxu0 0.0
    %119 = vmatpush1.msra.mxu0 0.0
    %120 = vmatprep.subr.mxu0 0.0
    %121 = vmatpush1.msra.mxu0 0.0
    %122 = vmatprep.subr.mxu0 0.0
    %123 = vmatpush1.msra.mxu0 0.0
    %124 = vmatprep.subr.mxu0 0.0
    %125 = vmatpush1.msra.mxu0 0.0
    %126 = vmatprep.subr.mxu0 0.0
    %127 = vmatpush1.msra.mxu0 0.0
    %128 = vmatprep.subr.mxu0 0.0
    %129 = vmatpush1.msra.mxu0 0.0
    %130 = vmatprep.subr.mxu0 0.0
    %131 = vmatpush1.msra.mxu0 0.0
    %132 = vmatprep.subr.mxu0 0.0
    %133 = vmatpush1.msra.mxu0 0.0
    %134 = vmatprep.subr.mxu0 0.0
    %135 = vmatpush1.msra.mxu0 0.0
    %136 = vmatprep.mubr.f32.mxu0 0.0
    %137 = vmatmul.mubr.f32.gmra.mrb[0].mxu0 %v56
    %v138 = vpop.f32.mrb[0].mxu0
    %v139 = vadd.f32 0.0, %v138
    %v140 = vpop.f32.mrb[0].mxu0
    %v141 = vadd.f32 0.0, %v140
    %142 = vmatprep.mubr.f32.mxu0 0.0
    %143 = vmatmul.mubr.f32.gmra.mrb[0].mxu0 %v59
    %v144 = vpop.f32.mrb[0].mxu0
    %v145 = vadd.f32 0.0, %v144
    %v146 = vpop.f32.mrb[0].mxu0
    %v147 = vadd.f32 0.0, %v146
    %148 = vmatprep.mubr.f32.mxu0 0.0
    %149 = vmatmul.mubr.f32.gmra.mrb[0].mxu0 %v62
    %v150 = vpop.f32.mrb[0].mxu0
    %v151 = vadd.f32 0.0, %v150
    %v152 = vpop.f32.mrb[0].mxu0
    %v153 = vadd.f32 0.0, %v152
    %154 = vmatprep.mubr.f32.mxu0 0.0
    %155 = vmatmul.mubr.f32.gmra.mrb[0].mxu0 %v65
    %v156 = vpop.f32.mrb[0].mxu0
    %v157 = vadd.f32 0.0, %v156
    %v158 = vpop.f32.mrb[0].mxu0
    %v159 = vadd.f32 0.0, %v158
    %160 = vdwg.mxu0
    %161 = vst [vmem:[#allocation2] sm:$0xff] %v139
    %162 = vst [vmem:[#allocation2 + $0x8] sm:$0xff] %v141
    %163 = vst [vmem:[#allocation2 + $0x10] sm:$0xff] %v145
    %164 = vst [vmem:[#allocation2 + $0x18] sm:$0xff] %v147
    %165 = vst [vmem:[#allocation2 + $0x20] sm:$0xff] %v151
    %166 = vst [vmem:[#allocation2 + $0x28] sm:$0xff] %v153
    %167 = vst [vmem:[#allocation2 + $0x30] sm:$0xff] %v157
    %168 = vst [vmem:[#allocation2 + $0x38] sm:$0xff] %v159
    %s169 = scalar_lea.vmem %s0, 8
    %v170 = vld [vmem:[%s169] sm:$0xff]
    %v171 = vmul.f32 %v170, %v35
    %v172 = vadd.f32 %v171, %v48
    %v173 = vmax.f32 %v172, 0.0
    %v175 = vcombine.high %v173, %v173
    %v176 = vsel %vm67, %v173, 0
    %v178 = vsel %vm67, %v175, 0
    %180 = vmatprep.subr.mxu0 %v178
    %181 = vmatpush1.msra.mxu0 %v176
    %182 = vmatprep.subr.mxu0 0.0
    %183 = vmatpush1.msra.mxu0 0.0
    %184 = vmatprep.subr.mxu0 0.0
    %185 = vmatpush1.msra.mxu0 0.0
    %186 = vmatprep.subr.mxu0 0.0
    %187 = vmatpush1.msra.mxu0 0.0
    %188 = vmatprep.subr.mxu0 0.0
    %189 = vmatpush1.msra.mxu0 0.0
    %190 = vmatprep.subr.mxu0 0.0
    %191 = vmatpush1.msra.mxu0 0.0
    %192 = vmatprep.subr.mxu0 0.0
    %193 = vmatpush1.msra.mxu0 0.0
    %194 = vmatprep.subr.mxu0 0.0
    %195 = vmatpush1.msra.mxu0 0.0
    %196 = vmatprep.subr.mxu0 0.0
    %197 = vmatpush1.msra.mxu0 0.0
    %198 = vmatprep.subr.mxu0 0.0
    %199 = vmatpush1.msra.mxu0 0.0
    %200 = vmatprep.subr.mxu0 0.0
    %201 = vmatpush1.msra.mxu0 0.0
    %202 = vmatprep.subr.mxu0 0.0
    %203 = vmatpush1.msra.mxu0 0.0
    %204 = vmatprep.subr.mxu0 0.0
    %205 = vmatpush1.msra.mxu0 0.0
    %206 = vmatprep.subr.mxu0 0.0
    %207 = vmatpush1.msra.mxu0 0.0
    %208 = vmatprep.subr.mxu0 0.0
    %209 = vmatpush1.msra.mxu0 0.0
    %210 = vmatprep.subr.mxu0 0.0
    %211 = vmatpush1.msra.mxu0 0.0
    %212 = vmatprep.subr.mxu0 0.0
    %213 = vmatpush1.msra.mxu0 0.0
    %214 = vmatprep.subr.mxu0 0.0
    %215 = vmatpush1.msra.mxu0 0.0
    %216 = vmatprep.subr.mxu0 0.0
    %217 = vmatpush1.msra.mxu0 0.0
    %218 = vmatprep.subr.mxu0 0.0
    %219 = vmatpush1.msra.mxu0 0.0
    %220 = vmatprep.subr.mxu0 0.0
    %221 = vmatpush1.msra.mxu0 0.0
    %222 = vmatprep.subr.mxu0 0.0
    %223 = vmatpush1.msra.mxu0 0.0
    %224 = vmatprep.subr.mxu0 0.0
    %225 = vmatpush1.msra.mxu0 0.0
    %226 = vmatprep.subr.mxu0 0.0
    %227 = vmatpush1.msra.mxu0 0.0
    %228 = vmatprep.subr.mxu0 0.0
    %229 = vmatpush1.msra.mxu0 0.0
    %230 = vmatprep.subr.mxu0 0.0
    %231 = vmatpush1.msra.mxu0 0.0
    %232 = vmatprep.subr.mxu0 0.0
    %233 = vmatpush1.msra.mxu0 0.0
    %234 = vmatprep.subr.mxu0 0.0
    %235 = vmatpush1.msra.mxu0 0.0
    %236 = vmatprep.subr.mxu0 0.0
    %237 = vmatpush1.msra.mxu0 0.0
    %238 = vmatprep.subr.mxu0 0.0
    %239 = vmatpush1.msra.mxu0 0.0
    %240 = vmatprep.subr.mxu0 0.0
    %241 = vmatpush1.msra.mxu0 0.0
    %242 = vmatprep.subr.mxu0 0.0
    %243 = vmatpush1.msra.mxu0 0.0
    %244 = vmatprep.mubr.f32.mxu0 0.0
    %245 = vmatmul.mubr.f32.gmra.mrb[0].mxu0 %v56
    %v246 = vpop.f32.mrb[0].mxu0
    %v247 = vadd.f32 0.0, %v246
    %v248 = vpop.f32.mrb[0].mxu0
    %v249 = vadd.f32 0.0, %v248
    %250 = vmatprep.mubr.f32.mxu0 0.0
    %251 = vmatmul.mubr.f32.gmra.mrb[0].mxu0 %v59
    %v252 = vpop.f32.mrb[0].mxu0
    %v253 = vadd.f32 0.0, %v252
    %v254 = vpop.f32.mrb[0].mxu0
    %v255 = vadd.f32 0.0, %v254
    %256 = vmatprep.mubr.f32.mxu0 0.0
    %257 = vmatmul.mubr.f32.gmra.mrb[0].mxu0 %v62
    %v258 = vpop.f32.mrb[0].mxu0
    %v259 = vadd.f32 0.0, %v258
    %v260 = vpop.f32.mrb[0].mxu0
    %v261 = vadd.f32 0.0, %v260
    %262 = vmatprep.mubr.f32.mxu0 0.0
    %263 = vmatmul.mubr.f32.gmra.mrb[0].mxu0 %v65
    %v264 = vpop.f32.mrb[0].mxu0
    %v265 = vadd.f32 0.0, %v264
    %v266 = vpop.f32.mrb[0].mxu0
    %v267 = vadd.f32 0.0, %v266
    %268 = vdwg.mxu0
    %s269 = scalar_lea.vmem [#allocation2], 64
    %270 = vst [vmem:[%s269] sm:$0xff] %v247
    %271 = vst [vmem:[%s269 + $0x8] sm:$0xff] %v249
    %272 = vst [vmem:[%s269 + $0x10] sm:$0xff] %v253
    %273 = vst [vmem:[%s269 + $0x18] sm:$0xff] %v255
    %274 = vst [vmem:[%s269 + $0x20] sm:$0xff] %v259
    %275 = vst [vmem:[%s269 + $0x28] sm:$0xff] %v261
    %276 = vst [vmem:[%s269 + $0x30] sm:$0xff] %v265
    %277 = vst [vmem:[%s269 + $0x38] sm:$0xff] %v267
    // Predicated region
    $region18: #{tpu_custom_call.1} parent=1 // pred_check
      _
    $region19: #{tpu_custom_call.1} parent=1 // pred_check_branch
      %279 = sbr.rel (0) target = $region21
    $region20: #{tpu_custom_call.1} parent=1 // pred_region
      %s281 = ssub.s32 2048, 2048
      %282 = vsyncadd [#allocation3], %s281
      %s283 = sshll.u32 [#allocation2], 4
      %s284 = int_to_ptr.vmem [resolvable:$true] %s283
      %289 = dma.vmem_to_hbm [thread:$0]  %s284, 2048, %s4, [#allocation3], 256, 256, 16
    $region21: #{tpu_custom_call.1} parent=1 // pred_fallthru
      _
    // Predicated region
    $region22: #{tpu_custom_call.1} parent=1 // pred_check
      _
    $region23: #{tpu_custom_call.1} parent=1 // pred_check_branch
      %291 = sbr.rel (0) target = $region25
    $region24: #{tpu_custom_call.1} parent=1 // pred_region
      %292 = dma.done [#allocation3], 2048
    $region25: #{tpu_custom_call.1} parent=1 // pred_fallthru
      _
    %293 = vsyncpa [#allocation3], 1

</llo_original>
